<compile_context>
chip_gen: v7x
topology: tpu7x:2x2x1
jax: 0.10.0
libtpu: 0.0.40
codegen_flags: <defaults>
</compile_context>

<pallas_src>
import functools

import jax
import jax.numpy as jnp
from jax.experimental import pallas as pl
from jax.experimental.pallas import tpu as pltpu

_EPS = 1e-5

# ---------------------------------------------------------------------------
# Per-generation VMEM budget (queried once; conservative fallback).
# ---------------------------------------------------------------------------
_VMEM_BUDGET_CACHE = None


def _vmem_limit():
    """Scoped-VMEM limit to request: ~half physical VMEM, clamped to 32..64 MiB.

    v5e/v6e (128 MiB physical) -> 64 MiB; v7x (64 MiB physical) -> 32 MiB.
    """
    global _VMEM_BUDGET_CACHE
    if _VMEM_BUDGET_CACHE is None:
        cap = 64 * 1024 * 1024  # conservative default (v7x per-core physical)
        try:
            info = pltpu.get_tpu_info()
            c = int(getattr(info, "vmem_capacity_bytes", 0))
            if c > 0:
                cap = c
        except Exception:
            pass
        _VMEM_BUDGET_CACHE = max(32 * 1024 * 1024,
                                 min(cap // 2, 64 * 1024 * 1024))
    return _VMEM_BUDGET_CACHE


def _tile_target(vmem_limit):
    # Per-pipeline-buffer byte target: 4 buffers (in+out, double-buffered)
    # then occupy at most half the requested scoped-VMEM limit.
    return vmem_limit // 8


# ---------------------------------------------------------------------------
# Single-pass row norm: each row of an (R, L) slab is one normalization group.
# ---------------------------------------------------------------------------
def _row_norm_kernel(x_ref, o_ref, *, inv_len):
    x = x_ref[...].astype(jnp.float32)
    s = jnp.sum(x, axis=-1, keepdims=True)
    ss = jnp.sum(x * x, axis=-1, keepdims=True)
    mean = s * inv_len
    var = jnp.maximum(ss * inv_len - mean * mean, 0.0)   # clamp: cancellation
    o_ref[...] = ((x - mean) * jax.lax.rsqrt(var + _EPS)).astype(o_ref.dtype)


def _row_norm_tiled(rows, *, vmem_limit=None, tile_bytes=None):
    """Normalize each row of (R, L). Grid over row tiles; L kept whole."""
    R, L = rows.shape
    itemsize = rows.dtype.itemsize
    vmem_limit = vmem_limit or _vmem_limit()
    tile_bytes = tile_bytes or _tile_target(vmem_limit)
    row_bytes = max(L * itemsize, 1)

    if R <= 8:
        tr = R
    else:
        tr = min((max(tile_bytes // row_bytes, 8) // 8) * 8, (R // 8) * 8)

    nbytes = R * L * itemsize
    return pl.pallas_call(
        functools.partial(_row_norm_kernel, inv_len=1.0 / L),
        out_shape=jax.ShapeDtypeStruct((R, L), rows.dtype),
        grid=(pl.cdiv(R, tr),),
        in_specs=[pl.BlockSpec((tr, L), lambda i: (i, 0))],
        out_specs=pl.BlockSpec((tr, L), lambda i: (i, 0)),
        compiler_params=pltpu.CompilerParams(
            dimension_semantics=("parallel",),
            vmem_limit_bytes=vmem_limit),
        cost_estimate=pl.CostEstimate(
            flops=6 * R * L, transcendentals=R, bytes_accessed=2 * nbytes),
    )(rows)


# ---------------------------------------------------------------------------
# Split-reduction row norm (rows too long for a single pipelined tile).
# ---------------------------------------------------------------------------
def _row_stats_kernel(x_ref, mean_ref, rstd_ref, *, true_len, col_tile,
                      need_mask):
    j = pl.program_id(0)

    @pl.when(j == 0)
    def _():
        mean_ref[...] = jnp.zeros_like(mean_ref)
        rstd_ref[...] = jnp.zeros_like(rstd_ref)

    x = x_ref[...].astype(jnp.float32)
    if need_mask:  # static: only emitted when L is not a multiple of col_tile
        col = j * col_tile + jax.lax.broadcasted_iota(jnp.int32, x.shape, 1)
        x = jnp.where(col < true_len, x, 0.0)
    mean_ref[...] += jnp.sum(x, axis=-1, keepdims=True)       # running sum
    rstd_ref[...] += jnp.sum(x * x, axis=-1, keepdims=True)   # running sumsq

    @pl.when(j == pl.num_programs(0) - 1)
    def _():
        inv_len = 1.0 / true_len
        m = mean_ref[...] * inv_len
        var = jnp.maximum(rstd_ref[...] * inv_len - m * m, 0.0)
        mean_ref[...] = m
        rstd_ref[...] = jax.lax.rsqrt(var + _EPS)


def _row_apply_kernel(x_ref, mean_ref, rstd_ref, o_ref):
    x = x_ref[...].astype(jnp.float32)
    o_ref[...] = ((x - mean_ref[...]) * rstd_ref[...]).astype(o_ref.dtype)


def _col_tile(R, L, itemsize, per_buffer_bytes):
    raw = (per_buffer_bytes // max(R * itemsize, 1)) // 128 * 128
    tl = max(128, raw)
    return L if tl >= L else tl


def _row_norm_split(rows, *, vmem_limit=None, stats_tile_bytes=None,
                    apply_tile_bytes=None):
    """Two-pass row norm: pass 1 sum/sumsq over column tiles, pass 2 apply."""
    R, L = rows.shape
    itemsize = rows.dtype.itemsize
    vmem_limit = vmem_limit or _vmem_limit()
    # Stats pass only double-buffers the input (accumulators are resident),
    # so it can afford a column tile twice as wide as the apply pass.
    stats_tile_bytes = stats_tile_bytes or (vmem_limit // 4)
    apply_tile_bytes = apply_tile_bytes or (vmem_limit // 8)
    tl_s = _col_tile(R, L, itemsize, stats_tile_bytes)
    tl_a = _col_tile(R, L, itemsize, apply_tile_bytes)
    nbytes = R * L * itemsize

    mean, rstd = pl.pallas_call(
        functools.partial(_row_stats_kernel, true_len=L, col_tile=tl_s,
                          need_mask=(L % tl_s != 0)),
        out_shape=(jax.ShapeDtypeStruct((R, 1), jnp.float32),
                   jax.ShapeDtypeStruct((R, 1), jnp.float32)),
        grid=(pl.cdiv(L, tl_s),),
        in_specs=[pl.BlockSpec((R, tl_s), lambda j: (0, j))],
        out_specs=(pl.BlockSpec((R, 1), lambda j: (0, 0)),
                   pl.BlockSpec((R, 1), lambda j: (0, 0))),
        compiler_params=pltpu.CompilerParams(
            dimension_semantics=("arbitrary",),      # reduction axis
            vmem_limit_bytes=vmem_limit),
        cost_estimate=pl.CostEstimate(
            flops=3 * R * L, transcendentals=R,
            bytes_accessed=nbytes + 8 * R),
    )(rows)

    return pl.pallas_call(
        _row_apply_kernel,
        out_shape=jax.ShapeDtypeStruct((R, L), rows.dtype),
        grid=(pl.cdiv(L, tl_a),),
        in_specs=[pl.BlockSpec((R, tl_a), lambda j: (0, j)),
                  pl.BlockSpec((R, 1), lambda j: (0, 0)),
                  pl.BlockSpec((R, 1), lambda j: (0, 0))],
        out_specs=pl.BlockSpec((R, tl_a), lambda j: (0, j)),
        compiler_params=pltpu.CompilerParams(
            dimension_semantics=("parallel",),
            vmem_limit_bytes=vmem_limit),
        cost_estimate=pl.CostEstimate(
            flops=2 * R * L, transcendentals=0,
            bytes_accessed=2 * nbytes + 8 * R),
    )(rows, mean, rstd)


def _rows_norm(rows):
    R, L = rows.shape
    vmem_limit = _vmem_limit()
    min_rows = R if R <= 8 else 8
    # Single pass (2x HBM traffic) whenever even the minimum row-block's
    # double-buffered in+out footprint fits the budget; only genuinely huge
    # rows take the 3x-traffic split reduction.
    if 4 * min_rows * L * rows.dtype.itemsize <= (vmem_limit * 7) // 8:
        return _row_norm_tiled(rows, vmem_limit=vmem_limit)
    return _row_norm_split(rows, vmem_limit=vmem_limit)


# ---------------------------------------------------------------------------
# Batch norm (per-channel over N*H*W), NCHW-native (no host transposes).
# ---------------------------------------------------------------------------
def _channel_norm_kernel(x_ref, o_ref, *, inv_len):
    x = x_ref[...].astype(jnp.float32)            # (N, tc, S, L)
    s = (x.sum(axis=3, keepdims=True)
          .sum(axis=2, keepdims=True)
          .sum(axis=0, keepdims=True))            # (1, tc, 1, 1)
    ss = ((x * x).sum(axis=3, keepdims=True)
                 .sum(axis=2, keepdims=True)
                 .sum(axis=0, keepdims=True))
    mean = s * inv_len
    var = jnp.maximum(ss * inv_len - mean * mean, 0.0)
    o_ref[...] = ((x - mean) * jax.lax.rsqrt(var + _EPS)).astype(o_ref.dtype)


def _channel_stats_kernel(x_ref, mean_ref, rstd_ref, *, inv_len, n_true, tn,
                          need_mask):
    n_idx = pl.program_id(1)

    @pl.when(n_idx == 0)
    def _():
        mean_ref[...] = jnp.zeros_like(mean_ref)
        rstd_ref[...] = jnp.zeros_like(rstd_ref)

    x = x_ref[...].astype(jnp.float32)            # (tn, tc, S, L)
    if need_mask:  # static: only emitted when N is not a multiple of tn
        row = n_idx * tn + jax.lax.broadcasted_iota(jnp.int32, x.shape, 0)
        x = jnp.where(row < n_true, x, 0.0)
    mean_ref[...] += (x.sum(axis=3, keepdims=True)
                       .sum(axis=2, keepdims=True)
                       .sum(axis=0, keepdims=True))
    rstd_ref[...] += ((x * x).sum(axis=3, keepdims=True)
                             .sum(axis=2, keepdims=True)
                             .sum(axis=0, keepdims=True))

    @pl.when(n_idx == pl.num_programs(1) - 1)
    def _():
        m = mean_ref[...] * inv_len
        var = jnp.maximum(rstd_ref[...] * inv_len - m * m, 0.0)
        mean_ref[...] = m
        rstd_ref[...] = jax.lax.rsqrt(var + _EPS)


def _channel_apply_kernel(x_ref, mean_ref, rstd_ref, o_ref):
    x = x_ref[...].astype(jnp.float32)
    o_ref[...] = ((x - mean_ref[...]) * rstd_ref[...]).astype(o_ref.dtype)


def _batch_norm_nchw(x, *, vmem_limit=None, force_split=False,
                     tile_bytes=None, tc_override=None):
    N, C, H, W = x.shape
    HW = H * W
    itemsize = x.dtype.itemsize
    vmem_limit = vmem_limit or _vmem_limit()
    tile_bytes = tile_bytes or _tile_target(vmem_limit)

    # Lane/sublane-dense view of the native NCHW layout (pure reshape, no copy).
    if HW % 128 == 0:
        S, L = HW // 128, 128
    else:
        S, L = 1, HW
    x4 = x.reshape(N, C, S, L)
    chan_bytes = N * HW * itemsize
    nbytes = N * C * HW * itemsize
    inv_len = 1.0 / (N * HW)

    single_pass = (not force_split) and (4 * chan_bytes <= (vmem_limit * 7) // 8)

    if single_pass:
        # One grid step per channel group; per-channel reduction in-kernel.
        # Each grid step DMAs N contiguous runs of tc*HW elements.
        if tc_override is not None:
            tc = tc_override
        else:
            tc = min(C, max(1, tile_bytes // max(chan_bytes, 1)))
            if C >= 2:
                # Keep >= 2 grid steps: enables pipelining overlap and lets
                # v7x shard the "parallel" axis across both TensorCores.
                tc = min(tc, pl.cdiv(C, 2))
        out = pl.pallas_call(
            functools.partial(_channel_norm_kernel, inv_len=inv_len),
            out_shape=jax.ShapeDtypeStruct((N, C, S, L), x.dtype),
            grid=(pl.cdiv(C, tc),),
            in_specs=[pl.BlockSpec((N, tc, S, L), lambda c: (0, c, 0, 0))],
            out_specs=pl.BlockSpec((N, tc, S, L), lambda c: (0, c, 0, 0)),
            compiler_params=pltpu.CompilerParams(
                dimension_semantics=("parallel",),
                vmem_limit_bytes=vmem_limit),
            cost_estimate=pl.CostEstimate(
                flops=6 * N * C * HW, transcendentals=C,
                bytes_accessed=2 * nbytes),
        )(x4)
        return out.reshape(N, C, H, W)

    # Split reduction: grid (channel groups, batch tiles); the batch axis is
    # the reduction ("arbitrary") with resident per-channel sum/sumsq
    # accumulators, followed by a lane-dense apply pass.
    if tc_override is not None:
        tc = tc_override
    elif HW * itemsize < 4096:
        tc = min(C, 8)          # lengthen contiguous DMA runs for tiny maps
    else:
        tc = 1
    tn = max(1, min(N, tile_bytes // max(tc * HW * itemsize, 1)))
    grid = (pl.cdiv(C, tc), pl.cdiv(N, tn))
    stat_shape = jax.ShapeDtypeStruct((1, C, 1, 1), jnp.float32)
    stat_spec = pl.BlockSpec((1, tc, 1, 1), lambda c, n: (0, c, 0, 0))

    mean, rstd = pl.pallas_call(
        functools.partial(_channel_stats_kernel, inv_len=inv_len, n_true=N,
                          tn=tn, need_mask=(N % tn != 0)),
        out_shape=(stat_shape, stat_shape),
        grid=grid,
        in_specs=[pl.BlockSpec((tn, tc, S, L), lambda c, n: (n, c, 0, 0))],
        out_specs=(stat_spec, stat_spec),
        compiler_params=pltpu.CompilerParams(
            dimension_semantics=("parallel", "arbitrary"),
            vmem_limit_bytes=vmem_limit),
        cost_estimate=pl.CostEstimate(
            flops=3 * N * C * HW, transcendentals=C,
            bytes_accessed=nbytes + 8 * C),
    )(x4)

    out = pl.pallas_call(
        _channel_apply_kernel,
        out_shape=jax.ShapeDtypeStruct((N, C, S, L), x.dtype),
        grid=grid,
        in_specs=[pl.BlockSpec((tn, tc, S, L), lambda c, n: (n, c, 0, 0)),
                  stat_spec, stat_spec],
        out_specs=pl.BlockSpec((tn, tc, S, L), lambda c, n: (n, c, 0, 0)),
        compiler_params=pltpu.CompilerParams(
            dimension_semantics=("parallel", "parallel"),
            vmem_limit_bytes=vmem_limit),
        cost_estimate=pl.CostEstimate(
            flops=2 * N * C * HW, transcendentals=0,
            bytes_accessed=2 * nbytes + 8 * C),
    )(x4, mean, rstd)
    return out.reshape(N, C, H, W)


# ---------------------------------------------------------------------------
# NormWrapper.forward
# ---------------------------------------------------------------------------
def norm_wrapper_forward(x, num_channels, norm_type="instance"):
    """JAX/Pallas equivalent of NormWrapper.forward. x is NCHW."""
    N, C, H, W = x.shape
    assert C == num_channels
    if norm_type == "instance":
        return _rows_norm(x.reshape(N * C, H * W)).reshape(N, C, H, W)
    elif norm_type == "layer":
        return _rows_norm(x.reshape(N, C * H * W)).reshape(N, C, H, W)
    elif norm_type == "batch":
        return _batch_norm_nchw(x)
    else:
        return x


# ---------------------------------------------------------------------------
# Pure-JAX references (biased variance, eps inside sqrt — PyTorch semantics)
# ---------------------------------------------------------------------------
def _ref_instance(x):
    m = x.mean(axis=(2, 3), keepdims=True)
    v = x.var(axis=(2, 3), keepdims=True)
    return (x - m) / jnp.sqrt(v + _EPS)


def _ref_layer(x):
    m = x.mean(axis=(1, 2, 3), keepdims=True)
    v = x.var(axis=(1, 2, 3), keepdims=True)
    return (x - m) / jnp.sqrt(v + _EPS)


def _ref_batch(x):
    m = x.mean(axis=(0, 2, 3), keepdims=True)
    v = x.var(axis=(0, 2, 3), keepdims=True)
    return (x - m) / jnp.sqrt(v + _EPS)


if __name__ == "__main__":
    key = jax.random.PRNGKey(0)
    k0, k1, k2, k3 = jax.random.split(key, 4)

    # Primary small NCHW input.
    x = jax.random.normal(k0, (2, 4, 16, 16), dtype=jnp.float32)

    out_inst = jax.block_until_ready(norm_wrapper_forward(x, 4, "instance"))
    out_layer = jax.block_until_ready(norm_wrapper_forward(x, 4, "layer"))
    out_batch = jax.block_until_ready(norm_wrapper_forward(x, 4, "batch"))
    out_none = jax.block_until_ready(norm_wrapper_forward(x, 4, "none"))

    assert jnp.allclose(out_inst, _ref_instance(x), atol=2e-5, rtol=2e-5)
    assert jnp.allclose(out_layer, _ref_layer(x), atol=2e-5, rtol=2e-5)
    assert jnp.allclose(out_batch, _ref_batch(x), atol=2e-5, rtol=2e-5)
    assert jnp.array_equal(out_none, x)

    # Multi-tile row path (pipelined grid, padded final row block).
    x2 = jax.random.normal(k1, (4, 5, 16, 16), dtype=jnp.float32)
    out2 = _row_norm_tiled(x2.reshape(20, 256), tile_bytes=8192)
    out2 = jax.block_until_ready(out2).reshape(4, 5, 16, 16)
    assert jnp.allclose(out2, _ref_instance(x2), atol=2e-5, rtol=2e-5)

    # Single-pass batch path with a channel-group size that does not divide C
    # (padded final channel group, lane-dense HW%128==0 view).
    out2b = jax.block_until_ready(_batch_norm_nchw(x2, tc_override=2))
    assert jnp.allclose(out2b, _ref_batch(x2), atol=2e-5, rtol=2e-5)

    # Split-reduction row path with a padded, non-128-multiple reduction
    # length (layer norm over C*H*W = 147).
    x3 = jax.random.normal(k2, (2, 3, 7, 7), dtype=jnp.float32)
    out3 = _row_norm_split(x3.reshape(2, 147),
                           stats_tile_bytes=600, apply_tile_bytes=600)
    out3 = jax.block_until_ready(out3).reshape(2, 3, 7, 7)
    assert jnp.allclose(out3, _ref_layer(x3), atol=2e-5, rtol=2e-5)

    # Batch path with a narrow (non-128) spatial extent (single pass).
    out3b = jax.block_until_ready(norm_wrapper_forward(x3, 3, "batch"))
    assert jnp.allclose(out3b, _ref_batch(x3), atol=2e-5, rtol=2e-5)

    # Forced split batch path: exercises the (channel-group, N-tile) grid with
    # resident accumulators, padded N tiles (mask) and padded channel group.
    x4 = jax.random.normal(k3, (5, 3, 16, 16), dtype=jnp.float32)
    out4 = _batch_norm_nchw(x4, force_split=True, tile_bytes=6144,
                            tc_override=2)
    out4 = jax.block_until_ready(out4)
    assert jnp.allclose(out4, _ref_batch(x4), atol=2e-5, rtol=2e-5)

    print("KERNEL_OK")
</pallas_src>

<mosaic_0001>
module attributes {stable_mosaic.version = 11 : i64} {
  func.func @_row_norm_kernel(%arg0: i32, %arg1: memref<8x256xf32, #tpu.memory_space<vmem>>, %arg2: memref<8x256xf32, #tpu.memory_space<vmem>>) attributes {dimension_semantics = [#tpu.dimension_semantics<parallel>], iteration_bounds = array<i64: 1>, scalar_prefetch = 0 : i64, scratch_operands = 0 : i64, tpu.core_type = #tpu.core_type<tc>, window_params = [{transform_indices = @transform_0, window_bounds = array<i64: 8, 256>}, {transform_indices = @transform_1, window_bounds = array<i64: 8, 256>}]} {
    %c0 = arith.constant 0 : index
    %c0_0 = arith.constant 0 : index
    %0 = vector.load %arg1[%c0, %c0_0] : memref<8x256xf32, #tpu.memory_space<vmem>>, vector<8x256xf32>
    %cst = arith.constant dense<0.000000e+00> : vector<8xf32>
    %1 = vector.multi_reduction <add>, %0, %cst [1] : vector<8x256xf32> to vector<8xf32>
    %2 = vector.shape_cast %1 : vector<8xf32> to vector<8x1xf32>
    %3 = arith.mulf %0, %0 : vector<8x256xf32>
    %cst_1 = arith.constant dense<0.000000e+00> : vector<8xf32>
    %4 = vector.multi_reduction <add>, %3, %cst_1 [1] : vector<8x256xf32> to vector<8xf32>
    %5 = vector.shape_cast %4 : vector<8xf32> to vector<8x1xf32>
    %cst_2 = arith.constant 3.906250e-03 : f32
    %6 = vector.broadcast %cst_2 : f32 to vector<8x1xf32>
    %7 = arith.mulf %2, %6 : vector<8x1xf32>
    %cst_3 = arith.constant 3.906250e-03 : f32
    %8 = vector.broadcast %cst_3 : f32 to vector<8x1xf32>
    %9 = arith.mulf %5, %8 : vector<8x1xf32>
    %10 = arith.mulf %7, %7 : vector<8x1xf32>
    %11 = arith.subf %9, %10 : vector<8x1xf32>
    %cst_4 = arith.constant 0.000000e+00 : f32
    %12 = vector.broadcast %cst_4 : f32 to vector<8x1xf32>
    %13 = arith.maximumf %11, %12 : vector<8x1xf32>
    %14 = vector.broadcast %7 : vector<8x1xf32> to vector<8x256xf32>
    %15 = arith.subf %0, %14 : vector<8x256xf32>
    %cst_5 = arith.constant 9.99999974E-6 : f32
    %16 = vector.broadcast %cst_5 : f32 to vector<8x1xf32>
    %17 = arith.addf %13, %16 : vector<8x1xf32>
    %18 = math.rsqrt %17 : vector<8x1xf32>
    %19 = vector.broadcast %18 : vector<8x1xf32> to vector<8x256xf32>
    %20 = arith.mulf %15, %19 : vector<8x256xf32>
    %c0_6 = arith.constant 0 : index
    %c0_7 = arith.constant 0 : index
    %21 = vector.load %arg2[%c0_6, %c0_7] : memref<8x256xf32, #tpu.memory_space<vmem>>, vector<8x256xf32>
    tpu.vector_store %arg2[%c0_6, %c0_7], %20 {strides = array<i32>} : memref<8x256xf32, #tpu.memory_space<vmem>>, vector<8x256xf32>,
    return
  }
  func.func @transform_0(%arg0: i32) -> (i32, i32) {
    %c0_i32 = arith.constant 0 : i32
    %c0_i32_0 = arith.constant 0 : i32
    return %arg0, %c0_i32 : i32, i32
  }
  func.func @transform_1(%arg0: i32) -> (i32, i32) {
    %c0_i32 = arith.constant 0 : i32
    %c0_i32_0 = arith.constant 0 : i32
    return %arg0, %c0_i32 : i32, i32
  }
}

</mosaic_0001>

<llo_original>
// kernel: tpu_custom_call.1
$region0: #{tpu_custom_call.1}
  #allocation0 [shape = 'u32[]', space=smem, size = 0x4, offset = 0x4, fixed_abs, tag = 'smem constant byte address 0x4 - core index']
  #allocation1 [shape = 'u32[144,128]{1,0:T(1,128)}', space=vmem, size = 0x12000, scoped, tag = 'internal scratch']
  %s0 = inlined_call_operand.hbm [shape: f32[8,256], index: 0, kind: input, shape index: {}]
  %s1 = inlined_call_operand.hbm [shape: f32[8,256], index: 1, kind: output, shape index: {}]
  %s2 = sld [smem:[#allocation0]]
  $region18: #{tpu_custom_call.1} parent=0
    _
  %s4 = ssub.s32 1, %s2
  %s5 = scalar_select 0, %s4, %s2
  $region1: #{tpu_custom_call.1} parent=0
    #allocation2 [shape = 'u8[8192]{0}', space=vmem, size = 0x2000, scoped, tag = 'input window, operand 0, single buffered']
    #allocation3 [shape = 's32[1]{0}', space=sflag, size = 0x4, scoped, tag = 'scoped memory for tpu_custom_call.1']
    #allocation4 [shape = 's32[1]{0}', space=sflag, size = 0x4, scoped, tag = 'scoped memory for tpu_custom_call.1']
    #allocation5 [shape = 'u8[8192]{0}', space=vmem, size = 0x2000, scoped, tag = 'output window, operand 0, single buffered']
    %6 = vsyncpa [#allocation3], 0
    %7 = vsyncpa [#allocation4], 0
    // Predicated region
    $region2: #{tpu_custom_call.1} parent=1 // pred_check
      _
    $region3: #{tpu_custom_call.1} parent=1 // pred_check_branch
      %9 = sbr.rel (0) target = $region5
    $region4: #{tpu_custom_call.1} parent=1 // pred_region
      %s11 = ssub.s32 256, 256
      %12 = vsyncadd [#allocation3], %s11
      %s14 = sshll.u32 [#allocation2], 4
      %s15 = int_to_ptr.vmem [resolvable:$true] %s14
      %17 = dma.hbm_to_vmem [thread:$0]  %s0, 256, %s15, [#allocation3]
    $region5: #{tpu_custom_call.1} parent=1 // pred_fallthru
      _
    // Predicated region
    $region6: #{tpu_custom_call.1} parent=1 // pred_check
      _
    $region7: #{tpu_custom_call.1} parent=1 // pred_check_branch
      %19 = sbr.rel (0) target = $region9
    $region8: #{tpu_custom_call.1} parent=1 // pred_region
      %20 = dma.done [#allocation3], 256
    $region9: #{tpu_custom_call.1} parent=1 // pred_fallthru
      _
    %v21 = vld [vmem:[#allocation2] sm:$0xff]
    %v22 = vld [vmem:[#allocation2 + $0x8] sm:$0xff]
    %v23 = vadd.f32 %v21, %v22
    %24 = vadd.xlane.f32.xlu0 %v23
    %v25 = vpop.xlane.xlu0 %24
    %v26 = vmul.f32 %v21, %v21
    %v27 = vmul.f32 %v22, %v22
    %v28 = vadd.f32 %v26, %v27
    %29 = vadd.xlane.f32.xlu0 %v28
    %v30 = vpop.xlane.xlu0 %29
    %v31 = vmul.f32 %v25, 0.00390625
    %v32 = vmul.f32 %v30, 0.00390625
    %v33 = vmul.f32 %v31, %v31
    %v34 = vsub.f32 %v32, %v33
    %v35 = vmax.f32 %v34, 0.0
    %v36 = vsub.f32 %v21, %v31
    %v37 = vsub.f32 %v22, %v31
    %v38 = vadd.f32 %v35, 1e-05
    %v39 = vrsqrt.pop %v38
    %v40 = vmul.f32 %v36, %v39
    %v41 = vmul.f32 %v37, %v39
    %42 = vst [vmem:[#allocation5] sm:$0xff] %v40
    %43 = vst [vmem:[#allocation5 + $0x8] sm:$0xff] %v41
    // Predicated region
    $region10: #{tpu_custom_call.1} parent=1 // pred_check
      _
    $region11: #{tpu_custom_call.1} parent=1 // pred_check_branch
      %45 = sbr.rel (0) target = $region13
    $region12: #{tpu_custom_call.1} parent=1 // pred_region
      %s47 = ssub.s32 256, 256
      %48 = vsyncadd [#allocation4], %s47
      %s50 = sshll.u32 [#allocation5], 4
      %s51 = int_to_ptr.vmem [resolvable:$true] %s50
      %53 = dma.vmem_to_hbm [thread:$0]  %s51, 256, %s1, [#allocation4]
    $region13: #{tpu_custom_call.1} parent=1 // pred_fallthru
      _
    // Predicated region
    $region14: #{tpu_custom_call.1} parent=1 // pred_check
      _
    $region15: #{tpu_custom_call.1} parent=1 // pred_check_branch
      %55 = sbr.rel (0) target = $region17
    $region16: #{tpu_custom_call.1} parent=1 // pred_region
      %56 = dma.done [#allocation4], 256
    $region17: #{tpu_custom_call.1} parent=1 // pred_fallthru
      _
    %57 = vsyncpa [#allocation3], 1
    %58 = vsyncpa [#allocation4], 1

</llo_original>
